<compile_context>
chip_gen: v6e
topology: v6e:2x2x1
jax: 0.10.0
libtpu: 0.0.40
codegen_flags: <defaults>
</compile_context>

<pallas_src>
import functools

import jax
import jax.numpy as jnp
from jax import lax
from jax.experimental import pallas as pl
from jax.experimental.pallas import tpu as pltpu

LN_EPS = 1e-5  # PyTorch nn.LayerNorm default


def _round_up(a, b):
    return -(-a // b) * b


def _layernorm_f32(x_ref, g_ref, b_ref):
    # Single pass over x: mean and E[x^2] together; var clamped >= 0.
    x = x_ref[...].astype(jnp.float32)
    mean = jnp.mean(x, axis=-1, keepdims=True)
    var = jnp.mean(x * x, axis=-1, keepdims=True) - mean * mean
    inv = lax.rsqrt(jnp.maximum(var, 0.0) + LN_EPS)
    return (x - mean) * inv * g_ref[...] + b_ref[...]


def _prenorm_resident_kernel(x_ref, g_ref, b_ref, w_ref, bias_ref, o_ref):
    # W fully resident: one LN + one matmul per row tile.
    y = _layernorm_f32(x_ref, g_ref, b_ref)
    out = jnp.dot(y.astype(w_ref.dtype), w_ref[...],
                  preferred_element_type=jnp.float32)
    o_ref[...] = (out + bias_ref[...]).astype(o_ref.dtype)


def _prenorm_tiled_kernel(x_ref, g_ref, b_ref, w_ref, bias_ref, o_ref, y_ref):
    # O-tiled path: LayerNorm result cached in VMEM scratch across the inner
    # (arbitrary) O axis; recomputed only when a new row tile starts (j == 0).
    @pl.when(pl.program_id(1) == 0)
    def _():
        y_ref[...] = _layernorm_f32(x_ref, g_ref, b_ref).astype(y_ref.dtype)

    out = jnp.dot(y_ref[...], w_ref[...], preferred_element_type=jnp.float32)
    o_ref[...] = (out + bias_ref[...]).astype(o_ref.dtype)


def _vmem_capacity_bytes():
    try:
        return int(getattr(pltpu.get_tpu_info(), "vmem_capacity_bytes"))
    except Exception:
        return 64 * 1024 * 1024  # conservative (v7x-sized) fallback


@functools.partial(jax.jit, static_argnames=("block_rows", "block_out"))
def prenorm(x, gamma, beta, w, bias, *, block_rows=None, block_out=None):
    """PreNorm(dim, fn=Linear(dim, dim_out)) forward.

    x:     (B, N, D)
    gamma: (D,)   beta: (D,)      -- LayerNorm affine params
    w:     (D, O) bias: (O,)      -- the wrapped fn (Linear)
    returns (B, N, O)
    """
    B, N, D = x.shape
    O = w.shape[1]
    M = B * N

    # ---- generation-aware VMEM budget (v7x: ~48 MiB, v5e/v6e: ~96 MiB) ----
    vmem_cap = _vmem_capacity_bytes()
    budget = max(min(vmem_cap * 3 // 4, vmem_cap - (16 << 20)), 32 << 20)

    # ---- row tile ----
    if block_rows is None:
        block_rows = 512 if vmem_cap > (64 << 20) else 256
    tm = M if M <= block_rows else _round_up(block_rows, 8)
    grid_rows = pl.cdiv(M, tm)  # ragged last row tile handled by Pallas

    # ---- output-feature tiling / W residency decision ----
    O128 = _round_up(O, 128)          # VMEM lane-padded width of W / out
    xb, wb, ob = x.dtype.itemsize, w.dtype.itemsize, x.dtype.itemsize

    def fits(tn):
        w_bytes = 2 * D * tn * wb               # W slab (double-buffer bound)
        x_bytes = 2 * tm * D * xb               # input row tile
        o_bytes = 2 * tm * tn * ob              # output tile
        y_bytes = tm * D * wb                   # LN cache scratch
        tmp = 3 * tm * D * 4 + tm * tn * 4      # f32 temporaries + accumulator
        return w_bytes + x_bytes + o_bytes + y_bytes + tmp <= budget

    if block_out is not None:
        tn = _round_up(block_out, 128)
        resident = tn >= O
    else:
        resident = fits(O128)
        tn = 128
        if not resident:
            # Largest 128-multiple divisor of O128 that fits -> no extra padding
            # waste beyond the unavoidable <128-lane remainder.
            for k in range(O128 // 128, 0, -1):
                cand = k * 128
                if O128 % cand == 0 and fits(cand):
                    tn = cand
                    break

    # ---- small params to f32 once, on the host side ----
    g2 = gamma.astype(jnp.float32).reshape(1, D)
    b2 = beta.astype(jnp.float32).reshape(1, D)
    bias2 = bias.astype(jnp.float32).reshape(1, O)
    x2 = x.reshape(M, D)  # free metadata reshape; no padding, no extra HBM pass

    vmem_limit = min(vmem_cap, budget + (8 << 20))

    if resident:
        out2 = pl.pallas_call(
            _prenorm_resident_kernel,
            out_shape=jax.ShapeDtypeStruct((M, O), x.dtype),
            grid_spec=pltpu.PrefetchScalarGridSpec(
                num_scalar_prefetch=0,
                grid=(grid_rows,),
                in_specs=[
                    pl.BlockSpec((tm, D), lambda i: (i, 0)),   # x rows
                    pl.BlockSpec((1, D), lambda i: (0, 0)),    # gamma (resident)
                    pl.BlockSpec((1, D), lambda i: (0, 0)),    # beta  (resident)
                    pl.BlockSpec((D, O), lambda i: (0, 0)),    # W (fully resident)
                    pl.BlockSpec((1, O), lambda i: (0, 0)),    # bias (resident)
                ],
                out_specs=pl.BlockSpec((tm, O), lambda i: (i, 0)),
            ),
            compiler_params=pltpu.CompilerParams(
                dimension_semantics=("parallel",),
                vmem_limit_bytes=vmem_limit,
            ),
        )(x2, g2, b2, w, bias2)
    else:
        grid_o = pl.cdiv(O, tn)  # ragged last O tile handled by Pallas masking
        out2 = pl.pallas_call(
            _prenorm_tiled_kernel,
            out_shape=jax.ShapeDtypeStruct((M, O), x.dtype),
            grid_spec=pltpu.PrefetchScalarGridSpec(
                num_scalar_prefetch=0,
                grid=(grid_rows, grid_o),
                in_specs=[
                    pl.BlockSpec((tm, D), lambda i, j: (i, 0)),   # x rows (fetched once per i)
                    pl.BlockSpec((1, D), lambda i, j: (0, 0)),    # gamma
                    pl.BlockSpec((1, D), lambda i, j: (0, 0)),    # beta
                    pl.BlockSpec((D, tn), lambda i, j: (0, j)),   # W column slab
                    pl.BlockSpec((1, tn), lambda i, j: (0, j)),   # bias slab
                ],
                out_specs=pl.BlockSpec((tm, tn), lambda i, j: (i, j)),
                scratch_shapes=[pltpu.VMEM((tm, D), w.dtype)],    # LN cache
            ),
            compiler_params=pltpu.CompilerParams(
                dimension_semantics=("parallel", "arbitrary"),
                vmem_limit_bytes=vmem_limit,
            ),
        )(x2, g2, b2, w, bias2)

    return out2.reshape(B, N, O)


def _reference(x, gamma, beta, w, bias):
    xf = x.astype(jnp.float32)
    mean = jnp.mean(xf, axis=-1, keepdims=True)
    var = jnp.mean((xf - mean) ** 2, axis=-1, keepdims=True)
    xn = (xf - mean) / jnp.sqrt(var + LN_EPS)
    y = xn * gamma.astype(jnp.float32) + beta.astype(jnp.float32)
    return (y @ w.astype(jnp.float32) + bias.astype(jnp.float32)).astype(x.dtype)


if __name__ == "__main__":
    key = jax.random.PRNGKey(0)
    k1, k2, k3, k4, k5 = jax.random.split(key, 5)

    # ---- test 1: W-resident path (default) ----
    B, N, D, O = 2, 8, 32, 64
    x = jax.random.normal(k1, (B, N, D), dtype=jnp.float32)
    gamma = jnp.ones((D,), dtype=jnp.float32)   # LayerNorm init: gamma=1, beta=0
    beta = jnp.zeros((D,), dtype=jnp.float32)
    w = jax.random.normal(k2, (D, O), dtype=jnp.float32) * 0.02
    bias = jax.random.normal(k3, (O,), dtype=jnp.float32) * 0.01

    out = jax.block_until_ready(prenorm(x, gamma, beta, w, bias))
    ref = _reference(x, gamma, beta, w, bias)
    assert out.shape == (B, N, O)
    assert jnp.allclose(out, ref, atol=1e-4, rtol=1e-4)

    # ---- test 2: O-tiled path with LN cache (forced via block_out) ----
    O2 = 256
    w2 = jax.random.normal(k4, (D, O2), dtype=jnp.float32) * 0.02
    bias2 = jax.random.normal(k5, (O2,), dtype=jnp.float32) * 0.01
    out2 = jax.block_until_ready(prenorm(x, gamma, beta, w2, bias2, block_out=128))
    ref2 = _reference(x, gamma, beta, w2, bias2)
    assert out2.shape == (B, N, O2)
    assert jnp.allclose(out2, ref2, atol=1e-4, rtol=1e-4)

    print("KERNEL_OK")
</pallas_src>

<mosaic_0001>
module attributes {stable_mosaic.version = 11 : i64} {
  func.func @_prenorm_resident_kernel(%arg0: i32, %arg1: memref<16x32xf32, #tpu.memory_space<vmem>>, %arg2: memref<1x32xf32, #tpu.memory_space<vmem>>, %arg3: memref<1x32xf32, #tpu.memory_space<vmem>>, %arg4: memref<32x64xf32, #tpu.memory_space<vmem>>, %arg5: memref<1x64xf32, #tpu.memory_space<vmem>>, %arg6: memref<16x64xf32, #tpu.memory_space<vmem>>) attributes {dimension_semantics = [#tpu.dimension_semantics<parallel>], iteration_bounds = array<i64: 1>, scalar_prefetch = 0 : i64, scratch_operands = 0 : i64, tpu.core_type = #tpu.core_type<tc>, window_params = [{transform_indices = @transform_0, window_bounds = array<i64: 16, 32>}, {pipeline_mode = #tpu.pipeline_mode<synchronous>, transform_indices = @transform_1, window_bounds = array<i64: 1, 32>}, {pipeline_mode = #tpu.pipeline_mode<synchronous>, transform_indices = @transform_2, window_bounds = array<i64: 1, 32>}, {pipeline_mode = #tpu.pipeline_mode<synchronous>, transform_indices = @transform_3, window_bounds = array<i64: 32, 64>}, {pipeline_mode = #tpu.pipeline_mode<synchronous>, transform_indices = @transform_4, window_bounds = array<i64: 1, 64>}, {transform_indices = @transform_5, window_bounds = array<i64: 16, 64>}]} {
    %c0 = arith.constant 0 : index
    %c0_0 = arith.constant 0 : index
    %0 = vector.load %arg1[%c0, %c0_0] : memref<16x32xf32, #tpu.memory_space<vmem>>, vector<16x32xf32>
    %cst = arith.constant dense<0.000000e+00> : vector<16xf32>
    %1 = vector.multi_reduction <add>, %0, %cst [1] : vector<16x32xf32> to vector<16xf32>
    %2 = vector.shape_cast %1 : vector<16xf32> to vector<16x1xf32>
    %cst_1 = arith.constant 3.200000e+01 : f32
    %3 = vector.broadcast %cst_1 : f32 to vector<16x1xf32>
    %4 = arith.divf %2, %3 : vector<16x1xf32>
    %5 = arith.mulf %0, %0 : vector<16x32xf32>
    %cst_2 = arith.constant dense<0.000000e+00> : vector<16xf32>
    %6 = vector.multi_reduction <add>, %5, %cst_2 [1] : vector<16x32xf32> to vector<16xf32>
    %7 = vector.shape_cast %6 : vector<16xf32> to vector<16x1xf32>
    %cst_3 = arith.constant 3.200000e+01 : f32
    %8 = vector.broadcast %cst_3 : f32 to vector<16x1xf32>
    %9 = arith.divf %7, %8 : vector<16x1xf32>
    %10 = arith.mulf %4, %4 : vector<16x1xf32>
    %11 = arith.subf %9, %10 : vector<16x1xf32>
    %cst_4 = arith.constant 0.000000e+00 : f32
    %12 = vector.broadcast %cst_4 : f32 to vector<16x1xf32>
    %13 = arith.maximumf %11, %12 : vector<16x1xf32>
    %cst_5 = arith.constant 9.99999974E-6 : f32
    %14 = vector.broadcast %cst_5 : f32 to vector<16x1xf32>
    %15 = arith.addf %13, %14 : vector<16x1xf32>
    %16 = math.rsqrt %15 : vector<16x1xf32>
    %17 = vector.broadcast %4 : vector<16x1xf32> to vector<16x32xf32>
    %18 = arith.subf %0, %17 : vector<16x32xf32>
    %19 = vector.broadcast %16 : vector<16x1xf32> to vector<16x32xf32>
    %20 = arith.mulf %18, %19 : vector<16x32xf32>
    %c0_6 = arith.constant 0 : index
    %c0_7 = arith.constant 0 : index
    %21 = vector.load %arg2[%c0_6, %c0_7] : memref<1x32xf32, #tpu.memory_space<vmem>>, vector<1x32xf32>
    %22 = vector.broadcast %21 : vector<1x32xf32> to vector<16x32xf32>
    %23 = arith.mulf %20, %22 : vector<16x32xf32>
    %c0_8 = arith.constant 0 : index
    %c0_9 = arith.constant 0 : index
    %24 = vector.load %arg3[%c0_8, %c0_9] : memref<1x32xf32, #tpu.memory_space<vmem>>, vector<1x32xf32>
    %25 = vector.broadcast %24 : vector<1x32xf32> to vector<16x32xf32>
    %26 = arith.addf %23, %25 : vector<16x32xf32>
    %c0_10 = arith.constant 0 : index
    %c0_11 = arith.constant 0 : index
    %27 = vector.load %arg4[%c0_10, %c0_11] : memref<32x64xf32, #tpu.memory_space<vmem>>, vector<32x64xf32>
    %cst_12 = arith.constant dense<0.000000e+00> : vector<16x64xf32>
    %28 = tpu.matmul %26, %27, %cst_12 {dimension_numbers = #tpu.dot_dimension_numbers<[1], [0], [0], [1], [0, 0, 1, 1], [], []>} : vector<16x32xf32>, vector<32x64xf32>, vector<16x64xf32> -> vector<16x64xf32>
    %c0_13 = arith.constant 0 : index
    %c0_14 = arith.constant 0 : index
    %29 = vector.load %arg5[%c0_13, %c0_14] : memref<1x64xf32, #tpu.memory_space<vmem>>, vector<1x64xf32>
    %30 = vector.broadcast %29 : vector<1x64xf32> to vector<16x64xf32>
    %31 = arith.addf %28, %30 : vector<16x64xf32>
    %c0_15 = arith.constant 0 : index
    %c0_16 = arith.constant 0 : index
    %32 = vector.load %arg6[%c0_15, %c0_16] : memref<16x64xf32, #tpu.memory_space<vmem>>, vector<16x64xf32>
    tpu.vector_store %arg6[%c0_15, %c0_16], %31 {strides = array<i32>} : memref<16x64xf32, #tpu.memory_space<vmem>>, vector<16x64xf32>,
    return
  }
  func.func @transform_0(%arg0: i32) -> (i32, i32) {
    %c0_i32 = arith.constant 0 : i32
    %c0_i32_0 = arith.constant 0 : i32
    return %arg0, %c0_i32 : i32, i32
  }
  func.func @transform_1(%arg0: i32) -> (i32, i32) {
    %c0_i32 = arith.constant 0 : i32
    %c0_i32_0 = arith.constant 0 : i32
    %c0_i32_1 = arith.constant 0 : i32
    return %c0_i32, %c0_i32_0 : i32, i32
  }
  func.func @transform_2(%arg0: i32) -> (i32, i32) {
    %c0_i32 = arith.constant 0 : i32
    %c0_i32_0 = arith.constant 0 : i32
    %c0_i32_1 = arith.constant 0 : i32
    return %c0_i32, %c0_i32_0 : i32, i32
  }
  func.func @transform_3(%arg0: i32) -> (i32, i32) {
    %c0_i32 = arith.constant 0 : i32
    %c0_i32_0 = arith.constant 0 : i32
    %c0_i32_1 = arith.constant 0 : i32
    return %c0_i32, %c0_i32_0 : i32, i32
  }
  func.func @transform_4(%arg0: i32) -> (i32, i32) {
    %c0_i32 = arith.constant 0 : i32
    %c0_i32_0 = arith.constant 0 : i32
    %c0_i32_1 = arith.constant 0 : i32
    return %c0_i32, %c0_i32_0 : i32, i32
  }
  func.func @transform_5(%arg0: i32) -> (i32, i32) {
    %c0_i32 = arith.constant 0 : i32
    %c0_i32_0 = arith.constant 0 : i32
    return %arg0, %c0_i32 : i32, i32
  }
}

</mosaic_0001>

<llo_original>
// kernel: prenorm.1
$region0: #{prenorm.1}
  #allocation0 [shape = 'u32[]', space=smem, size = 0x4, offset = 0x4, fixed_abs, tag = 'smem constant byte address 0x4 - core index']
  #allocation1 [shape = 'u32[144,128]{1,0:T(1,128)}', space=vmem, size = 0x12000, scoped, tag = 'internal scratch']
  %s0 = inlined_call_operand.hbm [shape: f32[16,32], index: 0, kind: input, shape index: {}]
  %s1 = inlined_call_operand.vmem [shape: f32[1,32], index: 1, kind: input, shape index: {}]
  %s2 = inlined_call_operand.vmem [shape: f32[1,32], index: 2, kind: input, shape index: {}]
  %s3 = inlined_call_operand.hbm [shape: f32[32,64], index: 3, kind: input, shape index: {}]
  %s4 = inlined_call_operand.vmem [shape: f32[1,64], index: 4, kind: input, shape index: {}]
  %s5 = inlined_call_operand.hbm [shape: f32[16,64], index: 5, kind: output, shape index: {}]
  %s6 = sld [smem:[#allocation0]]
  $region38: #{prenorm.1} parent=0
    _
  %s8 = ssub.s32 1, %s6
  %s9 = scalar_select 0, %s8, %s6
  $region1: #{prenorm.1} parent=0
    #allocation2 [shape = 'u8[8192]{0}', space=vmem, size = 0x2000, scoped, tag = 'input window, operand 0, single buffered']
    #allocation3 [shape = 's32[1]{0}', space=sflag, size = 0x4, scoped, tag = 'scoped memory for prenorm.1']
    #allocation4 [shape = 's32[1]{0}', space=sflag, size = 0x4, scoped, tag = 'scoped memory for prenorm.1']
    #allocation5 [shape = 'u8[16384]{0}', space=vmem, size = 0x4000, scoped, tag = 'input window, operand 3, single buffered']
    #allocation6 [shape = 's32[1]{0}', space=sflag, size = 0x4, scoped, tag = 'scoped memory for prenorm.1']
    #allocation7 [shape = 'u8[8192]{0}', space=vmem, size = 0x2000, scoped, tag = 'output window, operand 0, single buffered']
    %10 = vsyncpa [#allocation3], 0
    %11 = vsyncpa [#allocation6], 0
    %12 = vsyncpa [#allocation4], 0
    // Predicated region
    $region2: #{prenorm.1} parent=1 // pred_check
      _
    $region3: #{prenorm.1} parent=1 // pred_check_branch
      %14 = sbr.rel (0) target = $region5
    $region4: #{prenorm.1} parent=1 // pred_region
      %s16 = ssub.s32 256, 256
      %17 = vsyncadd [#allocation3], %s16
      %s18 = sshll.u32 [#allocation2], 4
      %s19 = int_to_ptr.vmem [resolvable:$true] %s18
      %24 = dma.hbm_to_vmem [thread:$0]  %s0, 256, %s19, [#allocation3], 128, 128, 8
    $region5: #{prenorm.1} parent=1 // pred_fallthru
      _
    // Predicated region
    $region6: #{prenorm.1} parent=1 // pred_check
      _
    $region7: #{prenorm.1} parent=1 // pred_check_branch
      %26 = sbr.rel (0) target = $region9
    $region8: #{prenorm.1} parent=1 // pred_region
      _
    $region9: #{prenorm.1} parent=1 // pred_fallthru
      _
    // Predicated region
    $region10: #{prenorm.1} parent=1 // pred_check
      _
    $region11: #{prenorm.1} parent=1 // pred_check_branch
      %28 = sbr.rel (0) target = $region13
    $region12: #{prenorm.1} parent=1 // pred_region
      _
    $region13: #{prenorm.1} parent=1 // pred_fallthru
      _
    // Predicated region
    $region14: #{prenorm.1} parent=1 // pred_check
      _
    $region15: #{prenorm.1} parent=1 // pred_check_branch
      %30 = sbr.rel (0) target = $region17
    $region16: #{prenorm.1} parent=1 // pred_region
      %s32 = ssub.s32 512, 512
      %33 = vsyncadd [#allocation6], %s32
      %s34 = sshll.u32 [#allocation5], 4
      %s35 = int_to_ptr.vmem [resolvable:$true] %s34
      %40 = dma.hbm_to_vmem [thread:$0]  %s3, 512, %s35, [#allocation6], 128, 128, 8
    $region17: #{prenorm.1} parent=1 // pred_fallthru
      _
    // Predicated region
    $region18: #{prenorm.1} parent=1 // pred_check
      _
    $region19: #{prenorm.1} parent=1 // pred_check_branch
      %42 = sbr.rel (0) target = $region21
    $region20: #{prenorm.1} parent=1 // pred_region
      _
    $region21: #{prenorm.1} parent=1 // pred_fallthru
      _
    // Predicated region
    $region22: #{prenorm.1} parent=1 // pred_check
      _
    $region23: #{prenorm.1} parent=1 // pred_check_branch
      %44 = sbr.rel (0) target = $region25
    $region24: #{prenorm.1} parent=1 // pred_region
      %45 = dma.done [#allocation3], 256
    $region25: #{prenorm.1} parent=1 // pred_fallthru
      _
    // Predicated region
    $region26: #{prenorm.1} parent=1 // pred_check
      _
    $region27: #{prenorm.1} parent=1 // pred_check_branch
      %47 = sbr.rel (0) target = $region29
    $region28: #{prenorm.1} parent=1 // pred_region
      %48 = dma.done [#allocation6], 512
    $region29: #{prenorm.1} parent=1 // pred_fallthru
      _
    %v49 = vld [vmem:[#allocation2] sm:$0xff]
    %v50 = vld [vmem:[#allocation2 + $0x8] sm:$0xff]
    %vm51 = vcmask 261120
    %v52 = vsel %vm51, %v49, 0.0
    %53 = vadd.xlane.f32.xlu0 %v52
    %v54 = vpop.xlane.xlu0 %53
    %v55 = vsel %vm51, %v50, 0.0
    %56 = vadd.xlane.f32.xlu0 %v55
    %v57 = vpop.xlane.xlu0 %56
    %v58 = vrcp.pop 32.0
    %v59 = vmul.f32 %v54, %v58
    %v60 = vmul.f32 %v57, %v58
    %v61 = vmul.f32 %v49, %v49
    %v62 = vmul.f32 %v50, %v50
    %v63 = vsel %vm51, %v61, 0.0
    %64 = vadd.xlane.f32.xlu0 %v63
    %v65 = vpop.xlane.xlu0 %64
    %v66 = vsel %vm51, %v62, 0.0
    %67 = vadd.xlane.f32.xlu0 %v66
    %v68 = vpop.xlane.xlu0 %67
    %v69 = vmul.f32 %v65, %v58
    %v70 = vmul.f32 %v68, %v58
    %v71 = vmul.f32 %v59, %v59
    %v72 = vmul.f32 %v60, %v60
    %v73 = vsub.f32 %v69, %v71
    %v74 = vsub.f32 %v70, %v72
    %v75 = vmax.f32 %v73, 0.0
    %v76 = vmax.f32 %v74, 0.0
    %v77 = vadd.f32 %v75, 1e-05
    %v78 = vadd.f32 %v76, 1e-05
    %v79 = vrsqrt.pop %v77
    %v80 = vrsqrt.pop %v78
    %v81 = vsub.f32 %v49, %v59
    %v82 = vsub.f32 %v50, %v60
    %v83 = vmul.f32 %v81, %v79
    %v84 = vmul.f32 %v82, %v80
    %v85 = vld [vmem:[%s1] sm:$0x1]
    %v87 = vlaneseq
    %v88 = vshrl.u32 %v87, 7
    %v89 = vsub.s32 0, %v88
    %v90 = vrot.slane %v85, %v89
    %v92 = vmul.f32 %v83, %v90
    %v93 = vmul.f32 %v84, %v90
    %v94 = vld [vmem:[%s2] sm:$0x1]
    %v96 = vlaneseq
    %v97 = vshrl.u32 %v96, 7
    %v98 = vsub.s32 0, %v97
    %v99 = vrot.slane %v94, %v98
    %v101 = vadd.f32 %v92, %v99
    %v102 = vadd.f32 %v93, %v99
    %v103 = vld [vmem:[#allocation5] sm:$0xff]
    %v104 = vld [vmem:[#allocation5 + $0x8] sm:$0xff]
    %v105 = vld [vmem:[#allocation5 + $0x10] sm:$0xff]
    %v106 = vld [vmem:[#allocation5 + $0x18] sm:$0xff]
    %v107 = vld [vmem:[%s4] sm:$0x1]
    %v109 = vlaneseq
    %v110 = vshrl.u32 %v109, 7
    %v111 = vsub.s32 0, %v110
    %v112 = vrot.slane %v107, %v111
    %v115 = vsel %vm51, %v101, 0
    %v118 = vsel %vm51, %v102, 0
    %120 = vmatprep.subr.mxu0 0.0
    %121 = vmatpush1.msra.mxu0 0.0
    %122 = vmatprep.subr.mxu0 0.0
    %123 = vmatpush1.msra.mxu0 0.0
    %124 = vmatprep.subr.mxu0 0.0
    %125 = vmatpush1.msra.mxu0 0.0
    %126 = vmatprep.subr.mxu0 0.0
    %127 = vmatpush1.msra.mxu0 0.0
    %128 = vmatprep.subr.mxu0 0.0
    %129 = vmatpush1.msra.mxu0 0.0
    %130 = vmatprep.subr.mxu0 0.0
    %131 = vmatpush1.msra.mxu0 0.0
    %132 = vmatprep.subr.mxu0 0.0
    %133 = vmatpush1.msra.mxu0 0.0
    %134 = vmatprep.subr.mxu0 0.0
    %135 = vmatpush1.msra.mxu0 0.0
    %136 = vmatprep.subr.mxu0 0.0
    %137 = vmatpush1.msra.mxu0 0.0
    %138 = vmatprep.subr.mxu0 0.0
    %139 = vmatpush1.msra.mxu0 0.0
    %140 = vmatprep.subr.mxu0 0.0
    %141 = vmatpush1.msra.mxu0 0.0
    %142 = vmatprep.subr.mxu0 0.0
    %143 = vmatpush1.msra.mxu0 0.0
    %144 = vmatprep.subr.mxu0 0.0
    %145 = vmatpush1.msra.mxu0 %v106
    %146 = vmatprep.subr.mxu0 0.0
    %147 = vmatpush1.msra.mxu0 %v105
    %148 = vmatprep.subr.mxu0 0.0
    %149 = vmatpush1.msra.mxu0 %v104
    %150 = vmatprep.subr.mxu0 0.0
    %151 = vmatpush1.msra.mxu0 %v103
    %152 = vmatprep.subr.mxu0 0.0
    %153 = vmatpush2.msra.mxu0 0.0
    %154 = vmatprep.subr.mxu0 0.0
    %155 = vmatpush2.msra.mxu0 0.0
    %156 = vmatprep.subr.mxu0 0.0
    %157 = vmatpush2.msra.mxu0 0.0
    %158 = vmatprep.subr.mxu0 0.0
    %159 = vmatpush2.msra.mxu0 0.0
    %160 = vmatprep.subr.mxu0 0.0
    %161 = vmatpush2.msra.mxu0 0.0
    %162 = vmatprep.subr.mxu0 0.0
    %163 = vmatpush2.msra.mxu0 0.0
    %164 = vmatprep.subr.mxu0 0.0
    %165 = vmatpush2.msra.mxu0 0.0
    %166 = vmatprep.subr.mxu0 0.0
    %167 = vmatpush2.msra.mxu0 0.0
    %168 = vmatprep.subr.mxu0 0.0
    %169 = vmatpush2.msra.mxu0 0.0
    %170 = vmatprep.subr.mxu0 0.0
    %171 = vmatpush2.msra.mxu0 0.0
    %172 = vmatprep.subr.mxu0 0.0
    %173 = vmatpush2.msra.mxu0 0.0
    %174 = vmatprep.subr.mxu0 0.0
    %175 = vmatpush2.msra.mxu0 0.0
    %176 = vmatprep.subr.mxu0 0.0
    %177 = vmatpush2.msra.mxu0 0.0
    %178 = vmatprep.subr.mxu0 0.0
    %179 = vmatpush2.msra.mxu0 0.0
    %180 = vmatprep.subr.mxu0 0.0
    %181 = vmatpush2.msra.mxu0 0.0
    %182 = vmatprep.subr.mxu0 0.0
    %183 = vmatpush2.msra.mxu0 0.0
    %184 = vmatprep.mubr.f32.mxu0 0.0
    %185 = vmatmul.mubr.f32.gmra.mxu0 %v115
    %v186 = vpop.f32.mrf.mxu0
    %v187 = vadd.f32 %v112, %v186
    %v188 = vpop.f32.mrf.mxu0
    %189 = vmatprep.mubr.f32.mxu0 0.0
    %190 = vmatmul.mubr.f32.gmra.mxu0 %v118
    %v191 = vpop.f32.mrf.mxu0
    %v192 = vadd.f32 %v112, %v191
    %v193 = vpop.f32.mrf.mxu0
    %194 = vdwg.mxu0
    %vm195 = vcmask 523264
    %196 = vst.msk [vmem:[#allocation7] sm:$0xff] %vm195, %v187
    %197 = vst.msk [vmem:[#allocation7 + $0x8] sm:$0xff] %vm195, %v192
    // Predicated region
    $region30: #{prenorm.1} parent=1 // pred_check
      _
    $region31: #{prenorm.1} parent=1 // pred_check_branch
      %199 = sbr.rel (0) target = $region33
    $region32: #{prenorm.1} parent=1 // pred_region
      %s201 = ssub.s32 256, 256
      %202 = vsyncadd [#allocation4], %s201
      %s203 = sshll.u32 [#allocation7], 4
      %s204 = int_to_ptr.vmem [resolvable:$true] %s203
      %209 = dma.vmem_to_hbm [thread:$0]  %s204, 256, %s5, [#allocation4], 128, 128, 8
    $region33: #{prenorm.1} parent=1 // pred_fallthru
      _
    // Predicated region
    $region34: #{prenorm.1} parent=1 // pred_check
      _
    $region35: #{prenorm.1} parent=1 // pred_check_branch
      %211 = sbr.rel (0) target = $region37
    $region36: #{prenorm.1} parent=1 // pred_region
      %212 = dma.done [#allocation4], 256
    $region37: #{prenorm.1} parent=1 // pred_fallthru
      _
    %213 = vsyncpa [#allocation3], 1
    %214 = vsyncpa [#allocation6], 1
    %215 = vsyncpa [#allocation4], 1

</llo_original>
